<compile_context>
chip_gen: v6e
topology: v6e:2x2x1
jax: 0.10.0
libtpu: 0.0.40
codegen_flags: <defaults>
</compile_context>

<pallas_src>
import functools
import math

import jax
import jax.numpy as jnp
from jax.experimental import pallas as pl
from jax.experimental.pallas import tpu as pltpu


# ----------------------------- in-kernel helpers ----------------------------

def _ln(x, g, b, eps):
    mean = jnp.mean(x, axis=-1, keepdims=True)
    var = jnp.mean(jnp.square(x - mean), axis=-1, keepdims=True)
    return (x - mean) * jax.lax.rsqrt(var + eps) * g + b


def _mm_bias(x_f32, w_ref, b_ref):
    # bf16 MXU operands, f32 accumulation.
    return jnp.dot(x_f32.astype(jnp.bfloat16),
                   w_ref[...].astype(jnp.bfloat16),
                   preferred_element_type=jnp.float32) + b_ref[...]


def _gelu(x):
    # TODO(synk): HF BERT default is exact erf-gelu; tanh approximation
    # (gelu_new) used here for a guaranteed EUP lowering.
    c = math.sqrt(2.0 / math.pi)
    return 0.5 * x * (1.0 + jnp.tanh(c * (x + 0.044715 * x * x * x)))


# ------------------------- embedding add + LayerNorm ------------------------

def _embed_ln_kernel(wemb_ref, pos_ref, tok_ref, g_ref, b_ref, o_ref, *, eps):
    x = (wemb_ref[0].astype(jnp.float32)
         + pos_ref[...].astype(jnp.float32)
         + tok_ref[...].astype(jnp.float32))
    o_ref[0] = _ln(x, g_ref[...], b_ref[...], eps).astype(o_ref.dtype)


def embed_layernorm(word_gathered, pos_emb, tok_row, g, b, eps=1e-12):
    B, S, H = word_gathered.shape
    return pl.pallas_call(
        functools.partial(_embed_ln_kernel, eps=eps),
        out_shape=jax.ShapeDtypeStruct((B, S, H), jnp.float32),
        grid=(B,),
        in_specs=[
            pl.BlockSpec((1, S, H), lambda i: (i, 0, 0)),
            pl.BlockSpec((S, H), lambda i: (0, 0)),
            pl.BlockSpec((1, H), lambda i: (0, 0)),
            pl.BlockSpec((1, H), lambda i: (0, 0)),
            pl.BlockSpec((1, H), lambda i: (0, 0)),
        ],
        out_specs=pl.BlockSpec((1, S, H), lambda i: (i, 0, 0)),
        compiler_params=pltpu.CompilerParams(dimension_semantics=("parallel",)),
    )(word_gathered, pos_emb, tok_row, g, b)


# -------------------------- fused transformer layer -------------------------

def _layer_kernel(x_ref, m_ref, wqkv_ref, bqkv_ref, wo_ref, bo_ref,
                  ln1g_ref, ln1b_ref, w1_ref, b1_ref, w2_ref, b2_ref,
                  ln2g_ref, ln2b_ref, o_ref, *, n_heads, eps):
    S, H = x_ref.shape[1], x_ref.shape[2]
    dh = H // n_heads
    scale = 1.0 / math.sqrt(dh)

    x = x_ref[0].astype(jnp.float32)                              # (S, H)
    # Additive mask broadcast in-kernel (HF convention: (1-mask)*-10000).
    neg = (1.0 - m_ref[...].astype(jnp.float32)) * (-10000.0)     # (1, S)

    # Fused QKV projection: single MXU matmul, split in VMEM.
    qkv = _mm_bias(x, wqkv_ref, bqkv_ref)                         # (S, 3H)
    q = qkv[:, 0:H] * scale                                       # scale folded in
    k = qkv[:, H:2 * H]
    v = qkv[:, 2 * H:3 * H]

    # Per-head attention.  The output projection is accumulated per head:
    #   sum_h ctx_h @ Wo[h*dh:(h+1)*dh, :]  ==  concat_h(ctx_h) @ Wo
    # which avoids a lane-dim concatenate in VMEM.
    attn_out = jnp.zeros((S, H), jnp.float32)
    for h in range(n_heads):                                      # static unroll
        lo = h * dh
        qh = q[:, lo:lo + dh].astype(jnp.bfloat16)
        kh = k[:, lo:lo + dh].astype(jnp.bfloat16)
        vh = v[:, lo:lo + dh].astype(jnp.bfloat16)
        s = jax.lax.dot_general(qh, kh, (((1,), (1,)), ((), ())),
                                preferred_element_type=jnp.float32)  # (S, S)
        s = s + neg
        s = s - jnp.max(s, axis=-1, keepdims=True)
        p = jnp.exp(s)
        p = p * pl.reciprocal(jnp.sum(p, axis=-1, keepdims=True), approx=True)
        ctx_h = jnp.dot(p.astype(jnp.bfloat16), vh,
                        preferred_element_type=jnp.float32)          # (S, dh)
        attn_out = attn_out + jnp.dot(
            ctx_h.astype(jnp.bfloat16),
            wo_ref[lo:lo + dh, :].astype(jnp.bfloat16),
            preferred_element_type=jnp.float32)
    attn_out = attn_out + bo_ref[...]

    # Residual + LayerNorm fused in the epilogue.
    x1 = _ln(attn_out + x, ln1g_ref[...], ln1b_ref[...], eps)

    # FFN.
    h1 = _gelu(_mm_bias(x1, w1_ref, b1_ref))
    ffn = _mm_bias(h1, w2_ref, b2_ref)
    x2 = _ln(ffn + x1, ln2g_ref[...], ln2b_ref[...], eps)

    o_ref[0] = x2.astype(o_ref.dtype)


def transformer_layer(x, mask_f32, lp, n_heads, eps=1e-12):
    B, S, H = x.shape
    I = lp["w1"].shape[1]
    # Concatenate Q/K/V weights into one (H, 3H) matmul.
    wqkv = jnp.concatenate([lp["wq"], lp["wk"], lp["wv"]], axis=1)
    bqkv = jnp.concatenate([lp["bq"], lp["bk"], lp["bv"]]).reshape(1, 3 * H)
    return pl.pallas_call(
        functools.partial(_layer_kernel, n_heads=n_heads, eps=eps),
        out_shape=jax.ShapeDtypeStruct((B, S, H), jnp.float32),
        grid=(B,),
        in_specs=[
            pl.BlockSpec((1, S, H), lambda i: (i, 0, 0)),     # x
            pl.BlockSpec((1, S), lambda i: (i, 0)),           # attention mask
            pl.BlockSpec((H, 3 * H), lambda i: (0, 0)),       # wqkv
            pl.BlockSpec((1, 3 * H), lambda i: (0, 0)),       # bqkv
            pl.BlockSpec((H, H), lambda i: (0, 0)),           # wo
            pl.BlockSpec((1, H), lambda i: (0, 0)),           # bo
            pl.BlockSpec((1, H), lambda i: (0, 0)),           # ln1_g
            pl.BlockSpec((1, H), lambda i: (0, 0)),           # ln1_b
            pl.BlockSpec((H, I), lambda i: (0, 0)),           # w1
            pl.BlockSpec((1, I), lambda i: (0, 0)),           # b1
            pl.BlockSpec((I, H), lambda i: (0, 0)),           # w2
            pl.BlockSpec((1, H), lambda i: (0, 0)),           # b2
            pl.BlockSpec((1, H), lambda i: (0, 0)),           # ln2_g
            pl.BlockSpec((1, H), lambda i: (0, 0)),           # ln2_b
        ],
        out_specs=pl.BlockSpec((1, S, H), lambda i: (i, 0, 0)),
        compiler_params=pltpu.CompilerParams(dimension_semantics=("parallel",)),
    )(x, mask_f32, wqkv, bqkv,
      lp["wo"], lp["bo"].reshape(1, H),
      lp["ln1_g"].reshape(1, H), lp["ln1_b"].reshape(1, H),
      lp["w1"], lp["b1"].reshape(1, I),
      lp["w2"], lp["b2"].reshape(1, H),
      lp["ln2_g"].reshape(1, H), lp["ln2_b"].reshape(1, H))


# ------------------------ fused pooler + classifier -------------------------

def _pool_cls_kernel(x0_ref, pw_ref, pb_ref, cw_ref, cb_ref, o_ref):
    x0 = x0_ref[...].astype(jnp.float32)                          # (B, H)
    pooled = jnp.tanh(_mm_bias(x0, pw_ref, pb_ref))
    # TODO(synk): Dropout(p=0.5) on pooled output is identity in eval mode;
    # training-mode stochastic dropout (pltpu.prng_*) not applied.
    logits = _mm_bias(pooled, cw_ref, cb_ref)
    o_ref[...] = logits.astype(o_ref.dtype)


def pool_and_classify(hidden0, pool_w, pool_b, cls_w, cls_b, num_labels,
                      pad_to=128):
    B, H = hidden0.shape
    n_pad = max(pad_to, num_labels)
    # Pad classifier columns to a lane-dense 128-wide output; slice outside.
    cls_w_p = jnp.zeros((H, n_pad), jnp.float32).at[:, :num_labels].set(cls_w)
    cls_b_p = jnp.zeros((1, n_pad), jnp.float32).at[:, :num_labels].set(cls_b)
    logits_p = pl.pallas_call(
        _pool_cls_kernel,
        out_shape=jax.ShapeDtypeStruct((B, n_pad), jnp.float32),
        grid=(1,),
        in_specs=[
            pl.BlockSpec((B, H), lambda i: (0, 0)),
            pl.BlockSpec((H, H), lambda i: (0, 0)),
            pl.BlockSpec((1, H), lambda i: (0, 0)),
            pl.BlockSpec((H, n_pad), lambda i: (0, 0)),
            pl.BlockSpec((1, n_pad), lambda i: (0, 0)),
        ],
        out_specs=pl.BlockSpec((B, n_pad), lambda i: (0, 0)),
    )(hidden0, pool_w, pool_b.reshape(1, H), cls_w_p, cls_b_p)
    return logits_p[:, :num_labels]


# ------------------------------ model wrapper --------------------------------

CONFIG = dict(
    vocab_size=100,
    hidden=32,
    num_heads=4,
    num_layers=2,
    intermediate=64,
    max_pos=16,
    type_vocab=2,
    num_labels=5,
)


def init_params(key, cfg):
    std = 0.02
    n_keys = 6 + cfg["num_layers"] * 8
    keys = iter(jax.random.split(key, n_keys))

    def w(shape):
        return (std * jax.random.normal(next(keys), shape)).astype(jnp.float32)

    H, I = cfg["hidden"], cfg["intermediate"]
    params = dict(
        word_emb=w((cfg["vocab_size"], H)),
        pos_emb=w((cfg["max_pos"], H)),
        tok_emb=w((cfg["type_vocab"], H)),
        emb_ln_g=jnp.ones((H,), jnp.float32),
        emb_ln_b=jnp.zeros((H,), jnp.float32),
        layers=[],
        pool_w=w((H, H)),
        pool_b=jnp.zeros((H,), jnp.float32),
        cls_w=w((H, cfg["num_labels"])),
        cls_b=jnp.zeros((cfg["num_labels"],), jnp.float32),
    )
    for _ in range(cfg["num_layers"]):
        params["layers"].append(dict(
            wq=w((H, H)), bq=jnp.zeros((H,), jnp.float32),
            wk=w((H, H)), bk=jnp.zeros((H,), jnp.float32),
            wv=w((H, H)), bv=jnp.zeros((H,), jnp.float32),
            wo=w((H, H)), bo=jnp.zeros((H,), jnp.float32),
            ln1_g=jnp.ones((H,), jnp.float32), ln1_b=jnp.zeros((H,), jnp.float32),
            w1=w((H, I)), b1=jnp.zeros((I,), jnp.float32),
            w2=w((I, H)), b2=jnp.zeros((H,), jnp.float32),
            ln2_g=jnp.ones((H,), jnp.float32), ln2_b=jnp.zeros((H,), jnp.float32),
        ))
    return params


def bert_multilabel_forward(params, input_ids, attention_mask, cfg):
    B, S = input_ids.shape
    H = cfg["hidden"]

    # Embedding table gather stays in XLA (data-dependent gather); the three
    # embedding adds + LayerNorm are fused into one Pallas kernel.
    word = params["word_emb"][input_ids]                       # (B, S, H)
    pos = params["pos_emb"][:S]                                # (S, H)
    tok = params["tok_emb"][0].reshape(1, H)                   # token_type_ids==0
    x = embed_layernorm(word, pos, tok,
                        params["emb_ln_g"].reshape(1, H),
                        params["emb_ln_b"].reshape(1, H))

    mask_f32 = attention_mask.astype(jnp.float32)
    for lp in params["layers"]:
        x = transformer_layer(x, mask_f32, lp, cfg["num_heads"])

    # Pooler (tanh on [CLS]) + classifier fused into one kernel.
    logits = pool_and_classify(x[:, 0, :], params["pool_w"], params["pool_b"],
                               params["cls_w"], params["cls_b"],
                               cfg["num_labels"])
    return logits


# --------------------------------- main --------------------------------------

if __name__ == "__main__":
    cfg = CONFIG
    B, S = 2, 8

    key = jax.random.PRNGKey(0)
    k_param, k_ids = jax.random.split(key)

    params = init_params(k_param, cfg)
    input_ids = jax.random.randint(k_ids, (B, S), 0, cfg["vocab_size"],
                                   dtype=jnp.int32)
    attention_mask = jnp.ones((B, S), dtype=jnp.int32).at[1, 6:].set(0)

    logits = bert_multilabel_forward(params, input_ids, attention_mask, cfg)
    logits = jax.block_until_ready(logits)

    assert logits.shape == (B, cfg["num_labels"])
    assert logits.dtype == jnp.float32
    assert bool(jnp.all(jnp.isfinite(logits)))
    print("KERNEL_OK")
</pallas_src>

<mosaic_0001>
module attributes {stable_mosaic.version = 11 : i64} {
  func.func @_embed_ln_kernel(%arg0: i32, %arg1: memref<1x8x32xf32, #tpu.memory_space<vmem>>, %arg2: memref<8x32xf32, #tpu.memory_space<vmem>>, %arg3: memref<1x32xf32, #tpu.memory_space<vmem>>, %arg4: memref<1x32xf32, #tpu.memory_space<vmem>>, %arg5: memref<1x32xf32, #tpu.memory_space<vmem>>, %arg6: memref<1x8x32xf32, #tpu.memory_space<vmem>>) attributes {dimension_semantics = [#tpu.dimension_semantics<parallel>], iteration_bounds = array<i64: 2>, scalar_prefetch = 0 : i64, scratch_operands = 0 : i64, tpu.core_type = #tpu.core_type<tc>, window_params = [{transform_indices = @transform_0, window_bounds = array<i64: 1, 8, 32>}, {pipeline_mode = #tpu.pipeline_mode<synchronous>, transform_indices = @transform_1, window_bounds = array<i64: 8, 32>}, {pipeline_mode = #tpu.pipeline_mode<synchronous>, transform_indices = @transform_2, window_bounds = array<i64: 1, 32>}, {pipeline_mode = #tpu.pipeline_mode<synchronous>, transform_indices = @transform_3, window_bounds = array<i64: 1, 32>}, {pipeline_mode = #tpu.pipeline_mode<synchronous>, transform_indices = @transform_4, window_bounds = array<i64: 1, 32>}, {transform_indices = @transform_5, window_bounds = array<i64: 1, 8, 32>}]} {
    %c0 = arith.constant 0 : index
    %c0_0 = arith.constant 0 : index
    %c0_1 = arith.constant 0 : index
    %0 = vector.load %arg1[%c0, %c0_0, %c0_1] : memref<1x8x32xf32, #tpu.memory_space<vmem>>, vector<1x8x32xf32>
    %1 = vector.shape_cast %0 : vector<1x8x32xf32> to vector<8x32xf32>
    %c0_2 = arith.constant 0 : index
    %c0_3 = arith.constant 0 : index
    %2 = vector.load %arg2[%c0_2, %c0_3] : memref<8x32xf32, #tpu.memory_space<vmem>>, vector<8x32xf32>
    %3 = arith.addf %1, %2 : vector<8x32xf32>
    %c0_4 = arith.constant 0 : index
    %c0_5 = arith.constant 0 : index
    %4 = vector.load %arg3[%c0_4, %c0_5] : memref<1x32xf32, #tpu.memory_space<vmem>>, vector<1x32xf32>
    %5 = vector.broadcast %4 : vector<1x32xf32> to vector<8x32xf32>
    %6 = arith.addf %3, %5 : vector<8x32xf32>
    %c0_6 = arith.constant 0 : index
    %c0_7 = arith.constant 0 : index
    %7 = vector.load %arg4[%c0_6, %c0_7] : memref<1x32xf32, #tpu.memory_space<vmem>>, vector<1x32xf32>
    %c0_8 = arith.constant 0 : index
    %c0_9 = arith.constant 0 : index
    %8 = vector.load %arg5[%c0_8, %c0_9] : memref<1x32xf32, #tpu.memory_space<vmem>>, vector<1x32xf32>
    %cst = arith.constant dense<0.000000e+00> : vector<8xf32>
    %9 = vector.multi_reduction <add>, %6, %cst [1] : vector<8x32xf32> to vector<8xf32>
    %10 = vector.shape_cast %9 : vector<8xf32> to vector<8x1xf32>
    %cst_10 = arith.constant 3.200000e+01 : f32
    %11 = vector.broadcast %cst_10 : f32 to vector<8x1xf32>
    %12 = arith.divf %10, %11 : vector<8x1xf32>
    %13 = vector.broadcast %12 : vector<8x1xf32> to vector<8x32xf32>
    %14 = arith.subf %6, %13 : vector<8x32xf32>
    %15 = arith.mulf %14, %14 : vector<8x32xf32>
    %cst_11 = arith.constant dense<0.000000e+00> : vector<8xf32>
    %16 = vector.multi_reduction <add>, %15, %cst_11 [1] : vector<8x32xf32> to vector<8xf32>
    %17 = vector.shape_cast %16 : vector<8xf32> to vector<8x1xf32>
    %cst_12 = arith.constant 3.200000e+01 : f32
    %18 = vector.broadcast %cst_12 : f32 to vector<8x1xf32>
    %19 = arith.divf %17, %18 : vector<8x1xf32>
    %20 = vector.broadcast %12 : vector<8x1xf32> to vector<8x32xf32>
    %21 = arith.subf %6, %20 : vector<8x32xf32>
    %cst_13 = arith.constant 9.99999996E-13 : f32
    %22 = vector.broadcast %cst_13 : f32 to vector<8x1xf32>
    %23 = arith.addf %19, %22 : vector<8x1xf32>
    %24 = math.rsqrt %23 : vector<8x1xf32>
    %25 = vector.broadcast %24 : vector<8x1xf32> to vector<8x32xf32>
    %26 = arith.mulf %21, %25 : vector<8x32xf32>
    %27 = vector.broadcast %7 : vector<1x32xf32> to vector<8x32xf32>
    %28 = arith.mulf %26, %27 : vector<8x32xf32>
    %29 = vector.broadcast %8 : vector<1x32xf32> to vector<8x32xf32>
    %30 = arith.addf %28, %29 : vector<8x32xf32>
    %c0_14 = arith.constant 0 : index
    %c0_15 = arith.constant 0 : index
    %c0_16 = arith.constant 0 : index
    %31 = vector.load %arg6[%c0_14, %c0_15, %c0_16] : memref<1x8x32xf32, #tpu.memory_space<vmem>>, vector<1x8x32xf32>
    %32 = vector.shape_cast %31 : vector<1x8x32xf32> to vector<8x32xf32>
    %33 = vector.shape_cast %30 : vector<8x32xf32> to vector<1x8x32xf32>
    tpu.vector_store %arg6[%c0_14, %c0_15, %c0_16], %33 {strides = array<i32>} : memref<1x8x32xf32, #tpu.memory_space<vmem>>, vector<1x8x32xf32>,
    return
  }
  func.func @transform_0(%arg0: i32) -> (i32, i32, i32) {
    %c0_i32 = arith.constant 0 : i32
    %c0_i32_0 = arith.constant 0 : i32
    %c0_i32_1 = arith.constant 0 : i32
    return %arg0, %c0_i32, %c0_i32_0 : i32, i32, i32
  }
  func.func @transform_1(%arg0: i32) -> (i32, i32) {
    %c0_i32 = arith.constant 0 : i32
    %c0_i32_0 = arith.constant 0 : i32
    %c0_i32_1 = arith.constant 0 : i32
    return %c0_i32, %c0_i32_0 : i32, i32
  }
  func.func @transform_2(%arg0: i32) -> (i32, i32) {
    %c0_i32 = arith.constant 0 : i32
    %c0_i32_0 = arith.constant 0 : i32
    %c0_i32_1 = arith.constant 0 : i32
    return %c0_i32, %c0_i32_0 : i32, i32
  }
  func.func @transform_3(%arg0: i32) -> (i32, i32) {
    %c0_i32 = arith.constant 0 : i32
    %c0_i32_0 = arith.constant 0 : i32
    %c0_i32_1 = arith.constant 0 : i32
    return %c0_i32, %c0_i32_0 : i32, i32
  }
  func.func @transform_4(%arg0: i32) -> (i32, i32) {
    %c0_i32 = arith.constant 0 : i32
    %c0_i32_0 = arith.constant 0 : i32
    %c0_i32_1 = arith.constant 0 : i32
    return %c0_i32, %c0_i32_0 : i32, i32
  }
  func.func @transform_5(%arg0: i32) -> (i32, i32, i32) {
    %c0_i32 = arith.constant 0 : i32
    %c0_i32_0 = arith.constant 0 : i32
    %c0_i32_1 = arith.constant 0 : i32
    return %arg0, %c0_i32, %c0_i32_0 : i32, i32, i32
  }
}

</mosaic_0001>

<llo_original>
// kernel: tpu_custom_call.1
$region0: #{tpu_custom_call.1}
  #allocation0 [shape = 'u32[]', space=smem, size = 0x4, offset = 0x4, fixed_abs, tag = 'smem constant byte address 0x4 - core index']
  #allocation1 [shape = 'u32[144,128]{1,0:T(1,128)}', space=vmem, size = 0x12000, scoped, tag = 'internal scratch']
  %s0 = inlined_call_operand.hbm [shape: f32[2,8,32], index: 0, kind: input, shape index: {}]
  %s1 = inlined_call_operand.hbm [shape: f32[8,32], index: 1, kind: input, shape index: {}]
  %s2 = inlined_call_operand.vmem [shape: f32[1,32], index: 2, kind: input, shape index: {}]
  %s3 = inlined_call_operand.vmem [shape: f32[1,32], index: 3, kind: input, shape index: {}]
  %s4 = inlined_call_operand.vmem [shape: f32[1,32], index: 4, kind: input, shape index: {}]
  %s5 = inlined_call_operand.hbm [shape: f32[2,8,32], index: 5, kind: output, shape index: {}]
  %s6 = sld [smem:[#allocation0]]
  $region61: #{tpu_custom_call.1} parent=0
    _
  %s8 = ssub.s32 1, %s6
  %s9 = scalar_select 0, %s8, %s6
  $region1: #{tpu_custom_call.1} parent=0
    #allocation2 [shape = 'u8[8192]{0}', space=vmem, size = 0x2000, scoped, tag = 'input window, operand 0']
    #allocation3 [shape = 's32[2]{0}', space=sflag, size = 0x8, scoped, tag = 'scoped memory for tpu_custom_call.1']
    #allocation4 [shape = 's32[2]{0}', space=sflag, size = 0x8, scoped, tag = 'scoped memory for tpu_custom_call.1']
    #allocation5 [shape = 'u8[4096]{0}', space=vmem, size = 0x1000, scoped, tag = 'input window, operand 1, single buffered']
    #allocation6 [shape = 's32[1]{0}', space=sflag, size = 0x4, scoped, tag = 'scoped memory for tpu_custom_call.1']
    #allocation7 [shape = 'u8[8192]{0}', space=vmem, size = 0x2000, scoped, tag = 'output window, operand 0']
    %10 = vsyncpa [#allocation3], 0
    %s11 = scalar_lea.sflag [#allocation3], 1
    %12 = vsyncpa %s11, 0
    %13 = vsyncpa [#allocation6], 0
    %14 = vsyncpa [#allocation4], 0
    %s15 = scalar_lea.sflag [#allocation4], 1
    %16 = vsyncpa %s15, 0
    loop: start=0, step=1, limit=4
    $region2: #{tpu_custom_call.1} parent=1 // loop_pre_header
      _
    $region3: #{tpu_custom_call.1} parent=1 // loop_header
      %s18 = sphi 0, %s22
      %p19 = scmp.ge.s32.totalorder %s18, 4
      %s28 = sphi 0, %s30
      %s31 = sphi 0, %s28
      %s32 = sphi 0, %s31
      %s48 = sphi 0, %s32
      %s52 = sphi 0, %s52
      %s54 = sphi 0, %s52
      %s55 = sphi 0, %s54
      %s69 = sphi 0, %s55
      %s73 = sphi 0, %s73
      %s75 = sphi 0, %s73
      %s76 = sphi 0, %s75
      %s90 = sphi 0, %s76
      %s94 = sphi 0, %s94
      %s96 = sphi 0, %s94
      %s97 = sphi 0, %s96
      %s111 = sphi 0, %s97
      %s115 = sphi 0, %s115
      %s117 = sphi 0, %s115
      %s118 = sphi 0, %s117
      %s132 = sphi 0, %s118
      %s138 = sphi 0, %s140
      %s141 = sphi 0, %s138
      %s142 = sphi 0, %s141
      %s158 = sphi 0, %s142
    $region4: #{tpu_custom_call.1} parent=1 // loop_header_branch
      %21 = sbr.rel (%p19) target = $region8
    $region5: #{tpu_custom_call.1} parent=1 // loop_body
      %s23 = ssub.s32 %s18, 1
      %s24 = ssub.s32 %s18, 2
      %s25 = sadd.s32 %s18, 1
      %s26 = ssub.s32 %s18, %s25
      %p27 = scmp.eq.s32.totalorder %s26, 0
      %s29 = sadd.s32 %s28, 1
      %s30 = scalar_select %p27, %s28, %s29
      %p33 = pneg %p27
      %p34 = scmp.eq.s32.totalorder %s18, 1
      %p35 = por %p33, %p34
      %p36 = scmp.ne.s32.totalorder %s28, %s31
      %p37 = scmp.eq.s32.totalorder %s18, 0
      %p38 = por %p36, %p37
      %p39 = scmp.ne.s32.totalorder %s28, %s31
      %p40 = scmp.eq.s32.totalorder %s23, 1
      %p41 = por %p39, %p40
      %p42 = scmp.ne.s32.totalorder %s31, %s32
      %p43 = scmp.eq.s32.totalorder %s23, 0
      %p44 = por %p42, %p43
      %p45 = scmp.ne.s32.totalorder %s31, %s32
      %p46 = scmp.eq.s32.totalorder %s24, 1
      %p47 = por %p45, %p46
      %p49 = scmp.ne.s32.totalorder %s32, %s48
      %p50 = scmp.eq.s32.totalorder %s24, 0
      %p51 = por %p49, %p50
      %s53 = sadd.s32 %s52, 1
      %p56 = scmp.eq.s32.totalorder %s18, 1
      %p57 = scmp.ne.s32.totalorder %s52, %s54
      %p58 = scmp.eq.s32.totalorder %s18, 0
      %p59 = por %p57, %p58
      %p60 = scmp.ne.s32.totalorder %s52, %s54
      %p61 = scmp.eq.s32.totalorder %s23, 1
      %p62 = por %p60, %p61
      %p63 = scmp.ne.s32.totalorder %s54, %s55
      %p64 = scmp.eq.s32.totalorder %s23, 0
      %p65 = por %p63, %p64
      %p66 = scmp.ne.s32.totalorder %s54, %s55
      %p67 = scmp.eq.s32.totalorder %s24, 1
      %p68 = por %p66, %p67
      %p70 = scmp.ne.s32.totalorder %s55, %s69
      %p71 = scmp.eq.s32.totalorder %s24, 0
      %p72 = por %p70, %p71
      %s74 = sadd.s32 %s73, 1
      %p77 = scmp.eq.s32.totalorder %s18, 1
      %p78 = scmp.ne.s32.totalorder %s73, %s75
      %p79 = scmp.eq.s32.totalorder %s18, 0
      %p80 = por %p78, %p79
      %p81 = scmp.ne.s32.totalorder %s73, %s75
      %p82 = scmp.eq.s32.totalorder %s23, 1
      %p83 = por %p81, %p82
      %p84 = scmp.ne.s32.totalorder %s75, %s76
      %p85 = scmp.eq.s32.totalorder %s23, 0
      %p86 = por %p84, %p85
      %p87 = scmp.ne.s32.totalorder %s75, %s76
      %p88 = scmp.eq.s32.totalorder %s24, 1
      %p89 = por %p87, %p88
      %p91 = scmp.ne.s32.totalorder %s76, %s90
      %p92 = scmp.eq.s32.totalorder %s24, 0
      %p93 = por %p91, %p92
      %s95 = sadd.s32 %s94, 1
      %p98 = scmp.eq.s32.totalorder %s18, 1
      %p99 = scmp.ne.s32.totalorder %s94, %s96
      %p100 = scmp.eq.s32.totalorder %s18, 0
      %p101 = por %p99, %p100
      %p102 = scmp.ne.s32.totalorder %s94, %s96
      %p103 = scmp.eq.s32.totalorder %s23, 1
      %p104 = por %p102, %p103
      %p105 = scmp.ne.s32.totalorder %s96, %s97
      %p106 = scmp.eq.s32.totalorder %s23, 0
      %p107 = por %p105, %p106
      %p108 = scmp.ne.s32.totalorder %s96, %s97
      %p109 = scmp.eq.s32.totalorder %s24, 1
      %p110 = por %p108, %p109
      %p112 = scmp.ne.s32.totalorder %s97, %s111
      %p113 = scmp.eq.s32.totalorder %s24, 0
      %p114 = por %p112, %p113
      %s116 = sadd.s32 %s115, 1
      %p119 = scmp.eq.s32.totalorder %s18, 1
      %p120 = scmp.ne.s32.totalorder %s115, %s117
      %p121 = scmp.eq.s32.totalorder %s18, 0
      %p122 = por %p120, %p121
      %p123 = scmp.ne.s32.totalorder %s115, %s117
      %p124 = scmp.eq.s32.totalorder %s23, 1
      %p125 = por %p123, %p124
      %p126 = scmp.ne.s32.totalorder %s117, %s118
      %p127 = scmp.eq.s32.totalorder %s23, 0
      %p128 = por %p126, %p127
      %p129 = scmp.ne.s32.totalorder %s117, %s118
      %p130 = scmp.eq.s32.totalorder %s24, 1
      %p131 = por %p129, %p130
      %p133 = scmp.ne.s32.totalorder %s118, %s132
      %p134 = scmp.eq.s32.totalorder %s24, 0
      %p135 = por %p133, %p134
      %s136 = ssub.s32 %s18, %s25
      %p137 = scmp.eq.s32.totalorder %s136, 0
      %s139 = sadd.s32 %s138, 1
      %s140 = scalar_select %p137, %s138, %s139
      %p143 = pneg %p137
      %p144 = scmp.eq.s32.totalorder %s18, 1
      %p145 = por %p143, %p144
      %p146 = scmp.ne.s32.totalorder %s138, %s141
      %p147 = scmp.eq.s32.totalorder %s18, 0
      %p148 = por %p146, %p147
      %p149 = scmp.ne.s32.totalorder %s138, %s141
      %p150 = scmp.eq.s32.totalorder %s23, 1
      %p151 = por %p149, %p150
      %p152 = scmp.ne.s32.totalorder %s141, %s142
      %p153 = scmp.eq.s32.totalorder %s23, 0
      %p154 = por %p152, %p153
      %p155 = scmp.ne.s32.totalorder %s141, %s142
      %p156 = scmp.eq.s32.totalorder %s24, 1
      %p157 = por %p155, %p156
      %p159 = scmp.ne.s32.totalorder %s142, %s158
      %p160 = scmp.eq.s32.totalorder %s24, 0
      %p161 = por %p159, %p160
      %p162 = scmp.le.s32.totalorder 1, %s18
      %p163 = scmp.lt.s32.totalorder %s18, 3
      %p164 = pnand %p162, %p163
      %p165 = pneg %p164
      // Predicated region
      $region9: #{tpu_custom_call.1} parent=5 // pred_check
        _
      $region10: #{tpu_custom_call.1} parent=5 // pred_check_branch
        %167 = sbr.rel (%p164) target = $region12
      $region11: #{tpu_custom_call.1} parent=5 // pred_region
        %s168 = ssub.s32 %s18, 1
        // Predicated region
        $region13: #{tpu_custom_call.1} parent=11 // pred_check
          %p169 = pneg %p65
        $region14: #{tpu_custom_call.1} parent=11 // pred_check_branch
          %171 = sbr.rel (%p169) target = $region16
        $region15: #{tpu_custom_call.1} parent=11 // pred_region
          %s173 = ssub.s32 128, 128
          %174 = vsyncadd [#allocation6], %s173
          %s176 = sshll.u32 [#allocation5], 4
          %s177 = int_to_ptr.vmem [resolvable:$true] %s176
          %179 = dma.hbm_to_vmem [thread:$0]  %s1, 128, %s177, [#allocation6]
        $region16: #{tpu_custom_call.1} parent=11 // pred_fallthru
          _
        // Predicated region
        $region17: #{tpu_custom_call.1} parent=11 // pred_check
          %p180 = pneg %p86
        $region18: #{tpu_custom_call.1} parent=11 // pred_check_branch
          %182 = sbr.rel (%p180) target = $region20
        $region19: #{tpu_custom_call.1} parent=11 // pred_region
          _
        $region20: #{tpu_custom_call.1} parent=11 // pred_fallthru
          _
        // Predicated region
        $region21: #{tpu_custom_call.1} parent=11 // pred_check
          %p183 = pneg %p107
        $region22: #{tpu_custom_call.1} parent=11 // pred_check_branch
          %185 = sbr.rel (%p183) target = $region24
        $region23: #{tpu_custom_call.1} parent=11 // pred_region
          _
        $region24: #{tpu_custom_call.1} parent=11 // pred_fallthru
          _
        // Predicated region
        $region25: #{tpu_custom_call.1} parent=11 // pred_check
          %p186 = pneg %p128
        $region26: #{tpu_custom_call.1} parent=11 // pred_check_branch
          %188 = sbr.rel (%p186) target = $region28
        $region27: #{tpu_custom_call.1} parent=11 // pred_region
          _
        $region28: #{tpu_custom_call.1} parent=11 // pred_fallthru
          _
      $region12: #{tpu_custom_call.1} parent=5 // pred_fallthru
        _
      %p189 = scmp.lt.s32.totalorder %s18, 2
      // Predicated region
      $region29: #{tpu_custom_call.1} parent=5 // pred_check
        %p190 = pneg %p189
      $region30: #{tpu_custom_call.1} parent=5 // pred_check_branch
        %192 = sbr.rel (%p190) target = $region32
      $region31: #{tpu_custom_call.1} parent=5 // pred_region
        // Predicated region
        $region33: #{tpu_custom_call.1} parent=31 // pred_check
          %p193 = pneg %p38
        $region34: #{tpu_custom_call.1} parent=31 // pred_check_branch
          %195 = sbr.rel (%p193) target = $region36
        $region35: #{tpu_custom_call.1} parent=31 // pred_region
          %s196 = sand.u32 %s28, 1
          %s197 = scalar_lea.sflag [#allocation3], %s196
          %s198 = sand.u32 %s28, 1
          %s199 = smul.addr %s198, 8
          %s200 = scalar_lea.vmem [#allocation2], %s199
          %s202 = ssub.s32 128, 128
          %203 = vsyncadd %s197, %s202
          %s204 = smul.addr %s18, 128
          %s205 = scalar_lea.hbm %s0, %s204
          %s207 = sshll.u32 %s200, 4
          %s208 = int_to_ptr.vmem [resolvable:$true] %s207
          %210 = dma.hbm_to_vmem [thread:$0]  %s205, 128, %s208, %s197
        $region36: #{tpu_custom_call.1} parent=31 // pred_fallthru
          _
      $region32: #{tpu_custom_call.1} parent=5 // pred_fallthru
        _
      %p211 = scmp.le.s32.totalorder 1, %s18
      %p212 = scmp.lt.s32.totalorder %s18, 3
      %p213 = pnand %p211, %p212
      %p214 = pneg %p213
      // Predicated region
      $region37: #{tpu_custom_call.1} parent=5 // pred_check
        _
      $region38: #{tpu_custom_call.1} parent=5 // pred_check_branch
        %216 = sbr.rel (%p213) target = $region40
      $region39: #{tpu_custom_call.1} parent=5 // pred_region
        %s217 = ssub.s32 %s18, 1
        %s218 = sand.u32 %s31, 1
        %s219 = scalar_lea.sflag [#allocation3], %s218
        %s220 = sand.u32 %s31, 1
        %s221 = smul.addr %s220, 8
        %s222 = scalar_lea.vmem [#allocation2], %s221
        // Predicated region
        $region41: #{tpu_custom_call.1} parent=39 // pred_check
          %p223 = pneg %p44
        $region42: #{tpu_custom_call.1} parent=39 // pred_check_branch
          %225 = sbr.rel (%p223) target = $region44
        $region43: #{tpu_custom_call.1} parent=39 // pred_region
          %226 = dma.done %s219, 128
        $region44: #{tpu_custom_call.1} parent=39 // pred_fallthru
          _
        // Predicated region
        $region45: #{tpu_custom_call.1} parent=39 // pred_check
          %p227 = pneg %p65
        $region46: #{tpu_custom_call.1} parent=39 // pred_check_branch
          %229 = sbr.rel (%p227) target = $region48
        $region47: #{tpu_custom_call.1} parent=39 // pred_region
          %230 = dma.done [#allocation6], 128
        $region48: #{tpu_custom_call.1} parent=39 // pred_fallthru
          _
        %s231 = sand.u32 %s31, 1
        %s232 = scalar_lea.sflag [#allocation3], %s231
        %s233 = sand.u32 %s31, 1
        %s234 = smul.addr %s233, 8
        %s235 = scalar_lea.vmem [#allocation2], %s234
        %p236 = pneg %p44
        %p237 = pneg %p41
        %p238 = pneg %p65
        %p239 = pneg %p62
        %p240 = pneg %p86
        %p241 = pneg %p83
        %p242 = pneg %p107
        %p243 = pneg %p104
        %p244 = pneg %p128
        %p245 = pneg %p125
        %p246 = pneg %p154
        %p247 = pneg %p151
        %s248 = sand.u32 %s141, 1
        %s249 = scalar_lea.sflag [#allocation4], %s248
        %s250 = sand.u32 %s141, 1
        %s251 = smul.addr %s250, 8
        %s252 = scalar_lea.vmem [#allocation7], %s251
        %v253 = vld [vmem:[%s222] sm:$0xff]
        %v254 = vld [vmem:[#allocation5] sm:$0xff]
        %v255 = vadd.f32 %v253, %v254
        %v256 = vld [vmem:[%s2] sm:$0x1]
        %v258 = vlaneseq
        %v259 = vshrl.u32 %v258, 7
        %v260 = vsub.s32 0, %v259
        %v261 = vrot.slane %v256, %v260
        %v263 = vadd.f32 %v255, %v261
        %v264 = vld [vmem:[%s3] sm:$0x1]
        %v265 = vld [vmem:[%s4] sm:$0x1]
        %vm266 = vcmask 261120
        %v267 = vsel %vm266, %v263, 0.0
        %268 = vadd.xlane.f32.xlu0 %v267
        %v269 = vpop.xlane.xlu0 %268
        %v270 = vrcp.pop 32.0
        %v271 = vmul.f32 %v269, %v270
        %v272 = vsub.f32 %v263, %v271
        %v273 = vmul.f32 %v272, %v272
        %v274 = vsel %vm266, %v273, 0.0
        %275 = vadd.xlane.f32.xlu0 %v274
        %v276 = vpop.xlane.xlu0 %275
        %v277 = vmul.f32 %v276, %v270
        %v278 = vadd.f32 %v277, 1e-12
        %v279 = vrsqrt.pop %v278
        %v280 = vmul.f32 %v272, %v279
        %v282 = vlaneseq
        %v283 = vshrl.u32 %v282, 7
        %v284 = vsub.s32 0, %v283
        %v285 = vrot.slane %v264, %v284
        %v287 = vmul.f32 %v280, %v285
        %v289 = vlaneseq
        %v290 = vshrl.u32 %v289, 7
        %v291 = vsub.s32 0, %v290
        %v292 = vrot.slane %v265, %v291
        %v294 = vadd.f32 %v287, %v292
        %295 = vst.msk [vmem:[%s252] sm:$0xff] %vm266, %v294
        %s296 = sand.u32 %s141, 1
        %s297 = scalar_lea.sflag [#allocation4], %s296
        %s298 = sand.u32 %s141, 1
        %s299 = smul.addr %s298, 8
        %s300 = scalar_lea.vmem [#allocation7], %s299
        // Predicated region
        $region49: #{tpu_custom_call.1} parent=39 // pred_check
          %p301 = pneg %p151
        $region50: #{tpu_custom_call.1} parent=39 // pred_check_branch
          %303 = sbr.rel (%p301) target = $region52
        $region51: #{tpu_custom_call.1} parent=39 // pred_region
          %s305 = ssub.s32 128, 128
          %306 = vsyncadd %s297, %s305
          %s307 = smul.addr %s23, 128
          %s308 = scalar_lea.hbm %s5, %s307
          %s310 = sshll.u32 %s300, 4
          %s311 = int_to_ptr.vmem [resolvable:$true] %s310
          %313 = dma.vmem_to_hbm [thread:$0]  %s311, 128, %s308, %s297
        $region52: #{tpu_custom_call.1} parent=39 // pred_fallthru
          _
      $region40: #{tpu_custom_call.1} parent=5 // pred_fallthru
        _
      %p314 = scmp.le.s32.totalorder 2, %s18
      // Predicated region
      $region53: #{tpu_custom_call.1} parent=5 // pred_check
        %p315 = pneg %p314
      $region54: #{tpu_custom_call.1} parent=5 // pred_check_branch
        %317 = sbr.rel (%p315) target = $region56
      $region55: #{tpu_custom_call.1} parent=5 // pred_region
        %s318 = ssub.s32 %s18, 2
        // Predicated region
        $region57: #{tpu_custom_call.1} parent=55 // pred_check
          %p319 = pneg %p157
        $region58: #{tpu_custom_call.1} parent=55 // pred_check_branch
          %321 = sbr.rel (%p319) target = $region60
        $region59: #{tpu_custom_call.1} parent=55 // pred_region
          %s322 = sand.u32 %s142, 1
          %s323 = scalar_lea.sflag [#allocation4], %s322
          %s324 = sand.u32 %s142, 1
          %s325 = smul.addr %s324, 8
          %s326 = scalar_lea.vmem [#allocation7], %s325
          %327 = dma.done %s323, 128
        $region60: #{tpu_custom_call.1} parent=55 // pred_fallthru
          _
      $region56: #{tpu_custom_call.1} parent=5 // pred_fallthru
        _
    $region6: #{tpu_custom_call.1} parent=1 // loop_footer
      %s22 = sadd.s32 1, %s18
    $region7: #{tpu_custom_call.1} parent=1 // loop_footer_branch
      %17 = sbr.rel target = $region3
    $region8: #{tpu_custom_call.1} parent=1 // loop_exit
      _
    %328 = vsyncpa [#allocation3], 1
    %s329 = scalar_lea.sflag [#allocation3], 1
    %330 = vsyncpa %s329, 1
    %331 = vsyncpa [#allocation6], 1
    %332 = vsyncpa [#allocation4], 1
    %s333 = scalar_lea.sflag [#allocation4], 1
    %334 = vsyncpa %s333, 1

</llo_original>
